<compile_context>
chip_gen: v7x
topology: tpu7x:2x2x1
jax: 0.10.0
libtpu: 0.0.40
codegen_flags: <defaults>
</compile_context>

<pallas_src>
import numpy as np
import jax
import jax.numpy as jnp
from jax.experimental import pallas as pl
from jax.experimental.pallas import tpu as pltpu


# --------------------------------------------------------------------------
# Hardware-aware sizing helpers (used by the non-donating copy path only)
# --------------------------------------------------------------------------
def _vmem_capacity_bytes() -> int:
    """Physical VMEM of the attached TPU; conservative default if unknown."""
    try:
        cap = getattr(pltpu.get_tpu_info(), "vmem_capacity_bytes", None)
        if cap:
            return int(cap)
    except Exception:
        pass
    return 64 * 1024 * 1024  # v7x-sized (smallest current generation)


def _block_byte_budget() -> int:
    """Per-block byte budget, generation aware.

    2 arrays x 2 pipeline buffers = 4 live blocks; keep them at <= ~1/4 of the
    explicit vmem limit requested below.
      * v5e / v6e (128 MiB physical VMEM) -> 6 MiB blocks
      * v7x        (64 MiB physical VMEM) -> 4 MiB blocks
    """
    return (6 if _vmem_capacity_bytes() >= 96 * 1024 * 1024 else 4) * 1024 * 1024


def _sublane_pack(dtype) -> int:
    """Native sublane packing: 8 (32-bit), 16 (bf16/f16), 32 (int8/fp8)."""
    bits = jnp.dtype(dtype).itemsize * 8
    return max(8, 256 // bits)


def _choose_tiles(rows: int, cols: int, dtype, budget: int) -> tuple[int, int]:
    itemsize = jnp.dtype(dtype).itemsize
    pack = _sublane_pack(dtype)

    # Column tile: full width when a packed row-slab fits the budget (a
    # full-extent block is always legal); otherwise a lane-dense multiple of
    # 128 capped by the budget -- even for non-128-multiple widths, so the
    # block can never blow the scoped VMEM limit.
    if cols * itemsize * pack <= budget or cols <= 128:
        tile_cols = cols
    else:
        tile_cols = max(128, (budget // (pack * itemsize)) // 128 * 128)
        tile_cols = min(tile_cols, cols)

    # Row tile: as many packed sublane groups as fit, or the full row extent.
    fit_rows = max(pack, (budget // max(tile_cols * itemsize, 1)) // pack * pack)
    tile_rows = rows if rows <= fit_rows else fit_rows
    return tile_rows, tile_cols


# --------------------------------------------------------------------------
# Kernels
# --------------------------------------------------------------------------
def _noop_kernel(x_hbm_ref, o_hbm_ref, flag_ref):
    # Zero-DMA identity: the output HBM buffer aliases the input buffer
    # (input_output_aliases={0: 0}), so no data movement is required.  The
    # tiny SMEM write keeps the body non-empty without touching HBM/VMEM.
    del x_hbm_ref, o_hbm_ref
    flag_ref[0] = jnp.int32(0)


def _copy_kernel(x_ref, o_ref):
    o_ref[...] = x_ref[...]


# --------------------------------------------------------------------------
# Non-donating identity: explicit lane-dense copy at full vst / DMA rate
# --------------------------------------------------------------------------
def _identity_copy(x: jax.Array, *, block_byte_budget=None) -> jax.Array:
    orig_shape = x.shape
    n = x.size
    if n == 0:
        return x

    # Present a lane-dense slab whenever possible: last dim a multiple of 128
    # -> unmasked full-lane stores.  The logical shape is irrelevant to an
    # identity copy; these reshapes are metadata-only.
    if n % 128 == 0:
        x2 = x.reshape(n // 128, 128)
    elif x.ndim >= 2:
        x2 = x.reshape(-1, orig_shape[-1])
    else:
        x2 = x.reshape(1, n)
    rows, cols = x2.shape

    budget = block_byte_budget or _block_byte_budget()
    tile_rows, tile_cols = _choose_tiles(rows, cols, x2.dtype, budget)
    grid = (pl.cdiv(rows, tile_rows), pl.cdiv(cols, tile_cols))

    itemsize = jnp.dtype(x2.dtype).itemsize
    vmem_limit = 4 * budget + 8 * 1024 * 1024  # 4 live blocks + headroom

    out2 = pl.pallas_call(
        _copy_kernel,
        out_shape=jax.ShapeDtypeStruct((rows, cols), x2.dtype),
        grid_spec=pltpu.PrefetchScalarGridSpec(
            num_scalar_prefetch=0,
            grid=grid,
            in_specs=[pl.BlockSpec((tile_rows, tile_cols), lambda i, j: (i, j))],
            out_specs=pl.BlockSpec((tile_rows, tile_cols), lambda i, j: (i, j)),
        ),
        # Pure-bandwidth op: let XLA's scheduler overlap it with neighbours.
        cost_estimate=pl.CostEstimate(
            flops=0, transcendentals=0, bytes_accessed=2 * n * itemsize),
        compiler_params=pltpu.CompilerParams(
            # TODO(synk): on v7x, CORE_PARALLEL on the row axis could let both
            # TensorCores issue DMAs; plain "parallel" is kept for portability.
            dimension_semantics=("parallel", "parallel"),
            vmem_limit_bytes=vmem_limit,
        ),
    )(x2)
    return out2.reshape(orig_shape)


# --------------------------------------------------------------------------
# Public wrapper
# --------------------------------------------------------------------------
def mlp_forward(x: jax.Array, *, donate: bool = True,
                block_byte_budget=None) -> jax.Array:
    """Pallas equivalent of MLP.forward (which performs no data transformation).

    donate=True (default): zero-DMA path -- the result aliases `x`'s HBM
    buffer, no bytes are moved, and `x` is donated (do not reuse it after).
    donate=False: non-donating lane-dense copy kernel.
    """
    # TODO(synk): the reference forward() returns None (no compute, no
    # parameters); identity on the input is the closest array-valued semantics.
    if not donate:
        return _identity_copy(x, block_byte_budget=block_byte_budget)
    try:
        return pl.pallas_call(
            _noop_kernel,
            out_shape=jax.ShapeDtypeStruct(x.shape, x.dtype),
            in_specs=[pl.BlockSpec(memory_space=pl.ANY)],
            out_specs=pl.BlockSpec(memory_space=pl.ANY),
            scratch_shapes=[pltpu.SMEM((1,), jnp.int32)],
            input_output_aliases={0: 0},
        )(x)
    except Exception:
        # Safety net: if the zero-DMA/alias path is unsupported on this
        # backend, fall back to the explicit copy (failure happens at
        # lowering/compile time, before `x` is consumed).
        return _identity_copy(x, block_byte_budget=block_byte_budget)


if __name__ == "__main__":
    key = jax.random.PRNGKey(0)

    # 1) Default zero-DMA path (donating): [batch=2, seq=8, hidden=32] f32.
    x = jax.random.normal(key, (2, 8, 32), dtype=jnp.float32)
    x_host = np.asarray(x)           # snapshot BEFORE the call: x is donated
    out = jax.block_until_ready(mlp_forward(x))
    assert out.shape == x_host.shape and out.dtype == x_host.dtype
    assert np.array_equal(np.asarray(out), x_host)

    # 2) Non-donating copy path, lane-dense slab (512 elems -> (4, 128)).
    x_f32 = jax.random.normal(jax.random.PRNGKey(1), (2, 8, 32), dtype=jnp.float32)
    out_f32 = jax.block_until_ready(mlp_forward(x_f32, donate=False))
    assert np.array_equal(np.asarray(out_f32), np.asarray(x_f32))

    # 3) Non-donating copy, bf16, multi-block grid with ragged last row tile
    #    (tiny budget forces tiling: (600, 128) slab, 256-row tiles, grid=(3,1)).
    x_bf16 = jax.random.normal(jax.random.PRNGKey(2), (3, 100, 256),
                               dtype=jnp.bfloat16)
    out_bf16 = jax.block_until_ready(
        mlp_forward(x_bf16, donate=False, block_byte_budget=64 * 1024))
    assert out_bf16.shape == x_bf16.shape and out_bf16.dtype == x_bf16.dtype
    assert np.array_equal(np.asarray(out_bf16).astype(np.float32),
                          np.asarray(x_bf16).astype(np.float32))

    # 4) Non-128-multiple 1-D fallback (full-extent block, masked tail).
    x_1d = jax.random.normal(jax.random.PRNGKey(3), (1000,), dtype=jnp.float32)
    out_1d = jax.block_until_ready(mlp_forward(x_1d, donate=False))
    assert np.array_equal(np.asarray(out_1d), np.asarray(x_1d))

    print("KERNEL_OK")
</pallas_src>

<mosaic_0001>
module attributes {stable_mosaic.version = 11 : i64} {
  func.func @_noop_kernel(%arg0: memref<2x8x32xf32, #tpu.memory_space<any>>, %arg1: memref<2x8x32xf32, #tpu.memory_space<any>>, %arg2: memref<1xi32, #tpu.memory_space<smem>>) attributes {dimension_semantics = [], scalar_prefetch = 0 : i64, scratch_operands = 1 : i64, tpu.core_type = #tpu.core_type<tc>} {
    %c0_i32 = arith.constant 0 : i32
    %c0 = arith.constant 0 : index
    %0 = memref.load %arg2[%c0] : memref<1xi32, #tpu.memory_space<smem>>
    memref.store %c0_i32, %arg2[%c0] : memref<1xi32, #tpu.memory_space<smem>>
    return
  }
}

module attributes {stable_mosaic.version = 11 : i64} {
  func.func @_copy_kernel(%arg0: i32, %arg1: i32, %arg2: memref<4x128xf32, #tpu.memory_space<vmem>>, %arg3: memref<4x128xf32, #tpu.memory_space<vmem>>) attributes {dimension_semantics = [#tpu.dimension_semantics<parallel>, #tpu.dimension_semantics<parallel>], iteration_bounds = array<i64: 1, 1>, scalar_prefetch = 0 : i64, scratch_operands = 0 : i64, tpu.core_type = #tpu.core_type<tc>, window_params = [{transform_indices = @transform_0, window_bounds = array<i64: 4, 128>}, {transform_indices = @transform_1, window_bounds = array<i64: 4, 128>}]} {
    %c0 = arith.constant 0 : index
    %c0_0 = arith.constant 0 : index
    %0 = vector.load %arg2[%c0, %c0_0] : memref<4x128xf32, #tpu.memory_space<vmem>>, vector<4x128xf32>
    %c0_1 = arith.constant 0 : index
    %c0_2 = arith.constant 0 : index
    %1 = vector.load %arg3[%c0_1, %c0_2] : memref<4x128xf32, #tpu.memory_space<vmem>>, vector<4x128xf32>
    tpu.vector_store %arg3[%c0_1, %c0_2], %0 {strides = array<i32>} : memref<4x128xf32, #tpu.memory_space<vmem>>, vector<4x128xf32>,
    return
  }
  func.func @transform_0(%arg0: i32, %arg1: i32) -> (i32, i32) {
    %c0_i32 = arith.constant 0 : i32
    return %arg0, %arg1 : i32, i32
  }
  func.func @transform_1(%arg0: i32, %arg1: i32) -> (i32, i32) {
    %c0_i32 = arith.constant 0 : i32
    return %arg0, %arg1 : i32, i32
  }
}

</mosaic_0001>

<llo_original>
// kernel: tpu_custom_call.1
$region0: #{tpu_custom_call.1}
  #allocation0 [shape = 'u32[]', space=smem, size = 0x4, offset = 0x4, fixed_abs, tag = 'smem constant byte address 0x4 - core index']
  #allocation1 [shape = 'u32[144,128]{1,0:T(1,128)}', space=vmem, size = 0x12000, scoped, tag = 'internal scratch']
  #allocation2 [shape = 's32[1]{0:T(128)}', space=smem, size = 0x200, scoped, tag = 'scratch operand']
  %s0 = inlined_call_operand.hbm [shape: f32[2,8,32], index: 0, kind: input, shape index: {}, may-alias: {0,1}]
  %s1 = inlined_call_operand.hbm [shape: f32[2,8,32], index: 1, kind: output, shape index: {}, may-alias: {0,1}]
  %s2 = sld [smem:[#allocation0]]
  $region2: #{tpu_custom_call.1} parent=0
    _
  %s4 = ssub.s32 1, %s2
  %s5 = scalar_select 0, %s4, %s2
  %s6 = scalar_lea.smem [#allocation2], 0
  %7 = sst [smem:[%s6]] 0

// kernel: tpu_custom_call.1
$region0: #{tpu_custom_call.1}
  #allocation0 [shape = 'u32[]', space=smem, size = 0x4, offset = 0x4, fixed_abs, tag = 'smem constant byte address 0x4 - core index']
  #allocation1 [shape = 'u32[144,128]{1,0:T(1,128)}', space=vmem, size = 0x12000, scoped, tag = 'internal scratch']
  %s0 = inlined_call_operand.hbm [shape: f32[4,128], index: 0, kind: input, shape index: {}]
  %s1 = inlined_call_operand.hbm [shape: f32[4,128], index: 1, kind: output, shape index: {}]
  %s2 = sld [smem:[#allocation0]]
  $region18: #{tpu_custom_call.1} parent=0
    _
  %s4 = ssub.s32 1, %s2
  %s5 = scalar_select 0, %s4, %s2
  $region1: #{tpu_custom_call.1} parent=0
    #allocation2 [shape = 'u8[2048]{0}', space=vmem, size = 0x800, scoped, tag = 'input window, operand 0, single buffered']
    #allocation3 [shape = 's32[1]{0}', space=sflag, size = 0x4, scoped, tag = 'scoped memory for tpu_custom_call.1']
    #allocation4 [shape = 's32[1]{0}', space=sflag, size = 0x4, scoped, tag = 'scoped memory for tpu_custom_call.1']
    #allocation5 [shape = 'u8[2048]{0}', space=vmem, size = 0x800, scoped, tag = 'output window, operand 0, single buffered']
    %6 = vsyncpa [#allocation3], 0
    %7 = vsyncpa [#allocation4], 0
    // Predicated region
    $region2: #{tpu_custom_call.1} parent=1 // pred_check
      _
    $region3: #{tpu_custom_call.1} parent=1 // pred_check_branch
      %9 = sbr.rel (0) target = $region5
    $region4: #{tpu_custom_call.1} parent=1 // pred_region
      %s11 = ssub.s32 64, 64
      %12 = vsyncadd [#allocation3], %s11
      %s14 = sshll.u32 [#allocation2], 4
      %s15 = int_to_ptr.vmem [resolvable:$true] %s14
      %17 = dma.hbm_to_vmem [thread:$0]  %s0, 64, %s15, [#allocation3]
    $region5: #{tpu_custom_call.1} parent=1 // pred_fallthru
      _
    // Predicated region
    $region6: #{tpu_custom_call.1} parent=1 // pred_check
      _
    $region7: #{tpu_custom_call.1} parent=1 // pred_check_branch
      %19 = sbr.rel (0) target = $region9
    $region8: #{tpu_custom_call.1} parent=1 // pred_region
      %20 = dma.done [#allocation3], 64
    $region9: #{tpu_custom_call.1} parent=1 // pred_fallthru
      _
    %v21 = vld [vmem:[#allocation2] sm:$0xf]
    %22 = vst [vmem:[#allocation5] sm:$0xf] %v21
    // Predicated region
    $region10: #{tpu_custom_call.1} parent=1 // pred_check
      _
    $region11: #{tpu_custom_call.1} parent=1 // pred_check_branch
      %24 = sbr.rel (0) target = $region13
    $region12: #{tpu_custom_call.1} parent=1 // pred_region
      %s26 = ssub.s32 64, 64
      %27 = vsyncadd [#allocation4], %s26
      %s29 = sshll.u32 [#allocation5], 4
      %s30 = int_to_ptr.vmem [resolvable:$true] %s29
      %32 = dma.vmem_to_hbm [thread:$0]  %s30, 64, %s1, [#allocation4]
    $region13: #{tpu_custom_call.1} parent=1 // pred_fallthru
      _
    // Predicated region
    $region14: #{tpu_custom_call.1} parent=1 // pred_check
      _
    $region15: #{tpu_custom_call.1} parent=1 // pred_check_branch
      %34 = sbr.rel (0) target = $region17
    $region16: #{tpu_custom_call.1} parent=1 // pred_region
      %35 = dma.done [#allocation4], 64
    $region17: #{tpu_custom_call.1} parent=1 // pred_fallthru
      _
    %36 = vsyncpa [#allocation3], 1
    %37 = vsyncpa [#allocation4], 1

</llo_original>
